<compile_context>
chip_gen: v5e
topology: v5e:2x2
jax: 0.10.0
libtpu: 0.0.40
codegen_flags: <defaults>
</compile_context>

<pallas_src>
import jax
import jax.numpy as jnp
from jax.experimental import pallas as pl
from jax.experimental.pallas import tpu as pltpu

# ----- criterion "parameters" (from __init__ semantics) ---------------------
NUM_CLASSES = 16          # no-object class index == NUM_CLASSES
EOS_COEF = 0.1
FOCAL_GAMMA = 0.5         # gamma == 0.5  ->  (1-pt)**gamma == sqrt(1-pt)
TEMPERATURE = 0.07
_INV_TEMPERATURE = 1.0 / TEMPERATURE

_CHUNK = 512              # in-kernel compute chunk (lanes); bounds live vregs


def _round_up(x, m):
    return ((x + m - 1) // m) * m


# --------------------------- fused Pallas kernel ----------------------------
def _criterion_kernel(nb_ref, counts_ref, logits_ref, tgt_ref,
                      src_box_ref, tgt_box_ref, out_ref,
                      acc_ce, acc_cor, acc_mat):
    """Fused focal-CE + class-error + L1 + GIoU losses.

    nb_ref      : [1]  f32 SMEM   num_boxes normalizer          (scalar prefetch)
    counts_ref  : [2]  i32 SMEM   [N_valid queries, M_valid pairs] (scalar prefetch)
    logits_ref  : [C1, BN] VMEM   transposed pred_logits block (queries on lanes)
    tgt_ref     : [1, BN] i32 VMEM dense target class per query (padded = NUM_CLASSES)
    src_box_ref : [4, Mp] f32 VMEM matched pred boxes (cx,cy,w,h on sublanes)
    tgt_box_ref : [4, Mp] f32 VMEM matched target boxes
    out_ref     : [4]  f32 SMEM   (loss_ce, class_error, loss_bbox, loss_giou)
    acc_*       : [1, 512] f32 VMEM lane-dense partial-sum accumulators
    """
    pid = pl.program_id(0)
    last = pl.num_programs(0) - 1
    c1, block_n = logits_ref.shape
    n_chunks = block_n // _CHUNK
    n_valid = counts_ref[0]

    @pl.when(pid == 0)
    def _init():
        acc_ce[...] = jnp.zeros_like(acc_ce)
        acc_cor[...] = jnp.zeros_like(acc_cor)
        acc_mat[...] = jnp.zeros_like(acc_mat)

    # ---------------- classification (lane-dense: queries on lanes) --------
    def chunk_body(c, carry):
        off = pl.multiple_of(c * _CHUNK, _CHUNK)
        logits = (logits_ref[:, pl.ds(off, _CHUNK)].astype(jnp.float32)
                  * _INV_TEMPERATURE)                                  # [C1, CH]
        tgt = tgt_ref[:, pl.ds(off, _CHUNK)]                           # [1,  CH]

        col = (jax.lax.broadcasted_iota(jnp.int32, (1, _CHUNK), 1)
               + pid * block_n + off)
        valid_b = col < n_valid                                        # [1, CH] bool
        valid = valid_b.astype(jnp.float32)
        # zero padded / out-of-range columns before exp (partial-block safety)
        logits = jnp.where(valid_b, logits, 0.0)

        class_iota = jax.lax.broadcasted_iota(jnp.int32, (c1, _CHUNK), 0)

        # cross entropy with integer targets = logsumexp - target logit
        col_max = jnp.max(logits, axis=0, keepdims=True)               # [1, CH]
        lse = col_max + jnp.log(
            jnp.sum(jnp.exp(logits - col_max), axis=0, keepdims=True))
        tgt_logit = jnp.sum(jnp.where(class_iota == tgt, logits, 0.0),
                            axis=0, keepdims=True)                     # [1, CH]
        ce = lse - tgt_logit

        # sigmoid focal modulation on the temperature-scaled target logit
        pt = jax.nn.sigmoid(tgt_logit)
        focal_mod = jnp.sqrt(jnp.maximum(1.0 - pt, 0.0))               # gamma = 0.5
        bg_weight = jnp.where(tgt == NUM_CLASSES, EOS_COEF, 1.0)
        acc_ce[...] += ce * focal_mod * bg_weight * valid

        # class error on matched queries (matched <=> assigned a real class).
        # "correct" iff target logit attains the column max (differs from
        # torch argmax only on exact float ties).
        matched = jnp.where(tgt != NUM_CLASSES, valid, 0.0)
        correct = jnp.where(tgt_logit >= col_max, matched, 0.0)
        acc_cor[...] += correct
        acc_mat[...] += matched
        return carry

    jax.lax.fori_loop(0, n_chunks, chunk_body, 0, unroll=True)

    # ---------------- boxes + finalize (once, on the last grid step) -------
    @pl.when(pid == last)
    def _finalize():
        sbox = src_box_ref[...].astype(jnp.float32)                    # [4, Mp]
        tbox = tgt_box_ref[...].astype(jnp.float32)
        mp = sbox.shape[1]
        lane = jax.lax.broadcasted_iota(jnp.int32, (1, mp), 1)
        bvalid = (lane < counts_ref[1]).astype(jnp.float32)            # [1, Mp]

        # L1 regression loss
        loss_bbox_sum = jnp.sum(jnp.abs(sbox - tbox) * bvalid)

        # cxcywh -> xyxy (lane-dense rows)
        def to_xyxy(b):
            cx, cy, w, h = b[0:1, :], b[1:2, :], b[2:3, :], b[3:4, :]
            return cx - 0.5 * w, cy - 0.5 * h, cx + 0.5 * w, cy + 0.5 * h

        sx0, sy0, sx1, sy1 = to_xyxy(sbox)
        tx0, ty0, tx1, ty1 = to_xyxy(tbox)
        area_s = (sx1 - sx0) * (sy1 - sy0)
        area_t = (tx1 - tx0) * (ty1 - ty0)

        ix0 = jnp.maximum(sx0, tx0)
        iy0 = jnp.maximum(sy0, ty0)
        ix1 = jnp.minimum(sx1, tx1)
        iy1 = jnp.minimum(sy1, ty1)
        inter = jnp.maximum(ix1 - ix0, 0.0) * jnp.maximum(iy1 - iy0, 0.0)
        union = area_s + area_t - inter
        union_safe = jnp.where(bvalid > 0.0, union, 1.0)
        iou = inter / union_safe                                       # exact div

        cx0 = jnp.minimum(sx0, tx0)
        cy0 = jnp.minimum(sy0, ty0)
        cx1 = jnp.maximum(sx1, tx1)
        cy1 = jnp.maximum(sy1, ty1)
        area_c = jnp.maximum(cx1 - cx0, 0.0) * jnp.maximum(cy1 - cy0, 0.0)
        area_c_safe = jnp.where(bvalid > 0.0, area_c, 1.0)
        giou = iou - (area_c - union) / area_c_safe                    # exact div
        loss_giou_sum = jnp.sum((1.0 - giou) * bvalid)

        # single cross-lane reductions of the VMEM accumulators
        ce_sum = jnp.sum(acc_ce[...])
        correct_sum = jnp.sum(acc_cor[...])
        matched_sum = jnp.sum(acc_mat[...])

        num_boxes = nb_ref[0]
        n_match = jnp.maximum(matched_sum, 1.0)   # guard: no matches -> no NaN
        out_ref[0] = ce_sum / num_boxes
        out_ref[1] = 100.0 - 100.0 * correct_sum / n_match
        out_ref[2] = loss_bbox_sum / num_boxes
        out_ref[3] = loss_giou_sum / num_boxes


# ---------------------------- device wrapper --------------------------------
def fused_criterion(pred_logits, target_classes, src_boxes, target_boxes,
                    num_boxes):
    """pred_logits [B,Q,C1], target_classes [B,Q] i32, src/target boxes [M,4],
    num_boxes scalar.  Intended to be traced under jax.jit."""
    B, Q, C1 = pred_logits.shape
    N = B * Q

    # lane-dense transpose: queries on the 128-lane axis (fused under jit).
    Np = _round_up(N, _CHUNK)
    block_n = min(8192, Np)
    n_blocks = pl.cdiv(Np, block_n)

    logits_t = jnp.pad(jnp.transpose(pred_logits.reshape(N, C1), (1, 0)),
                       ((0, 0), (0, Np - N)))                          # [C1, Np]
    tgt_row = jnp.pad(target_classes.reshape(1, N).astype(jnp.int32),
                      ((0, 0), (0, Np - N)), constant_values=NUM_CLASSES)

    M = int(src_boxes.shape[0])
    Mp = _round_up(max(M, 1), 128)
    src_t = jnp.pad(jnp.transpose(src_boxes.astype(jnp.float32), (1, 0)),
                    ((0, 0), (0, Mp - M)))                             # [4, Mp]
    tgt_t = jnp.pad(jnp.transpose(target_boxes.astype(jnp.float32), (1, 0)),
                    ((0, 0), (0, Mp - M)))

    nb = jnp.reshape(jnp.asarray(num_boxes, jnp.float32), (1,))
    counts = jnp.asarray([N, M], jnp.int32)

    out = pl.pallas_call(
        _criterion_kernel,
        out_shape=jax.ShapeDtypeStruct((4,), jnp.float32),
        grid_spec=pltpu.PrefetchScalarGridSpec(
            num_scalar_prefetch=2,                       # nb, counts -> SMEM
            grid=(n_blocks,),
            in_specs=[
                pl.BlockSpec((C1, block_n), lambda i, nb, cnt: (0, i)),   # logits^T
                pl.BlockSpec((1, block_n), lambda i, nb, cnt: (0, i)),    # targets
                pl.BlockSpec((4, Mp), lambda i, nb, cnt: (0, 0)),         # src boxes
                pl.BlockSpec((4, Mp), lambda i, nb, cnt: (0, 0)),         # tgt boxes
            ],
            out_specs=pl.BlockSpec(memory_space=pltpu.MemorySpace.SMEM),
            scratch_shapes=[pltpu.VMEM((1, _CHUNK), jnp.float32)] * 3,
        ),
        compiler_params=pltpu.CompilerParams(
            dimension_semantics=("arbitrary",),          # sequential reduction
            vmem_limit_bytes=32 * 1024 * 1024,
        ),
    )(nb, counts, logits_t, tgt_row, src_t, tgt_t)

    return {"loss_ce": out[0], "class_error": out[1],
            "loss_bbox": out[2], "loss_giou": out[3]}


@jax.jit
def _device_criterion(pred_logits, pred_boxes, flat_src, matched_labels,
                      flat_tgt, tgt_boxes_cat, num_boxes):
    """All device work (scatter/gather/transpose/pad + pallas_call) in one jit."""
    B, Q, _ = pred_logits.shape
    N = B * Q
    target_classes = (jnp.full((N,), NUM_CLASSES, jnp.int32)
                      .at[flat_src].set(matched_labels))
    src_boxes = pred_boxes.reshape(N, 4)[flat_src]
    target_boxes = tgt_boxes_cat[flat_tgt]
    return fused_criterion(pred_logits, target_classes.reshape(B, Q),
                           src_boxes, target_boxes, num_boxes)


# ----------------------------- host-side glue --------------------------------
def set_criterion_forward(outputs, targets, matches, losses=("labels", "boxes")):
    """Mirrors SetCriterion.forward for the 'labels' and 'boxes' losses."""
    indices, tgt_ids = matches
    B, Q, _ = outputs["pred_logits"].shape
    select_id = set(int(s) for s in outputs["select_id"])

    # ---- num_boxes (same select_id mask logic as the reference forward) ----
    num_boxes = sum(1 for t in targets for v in t["labels"] if int(v) in select_id)
    num_boxes = max(float(num_boxes), 1.0)   # world_size == 1

    # ---- flatten matcher output on the host (pure python indexing glue) ----
    flat_src, matched_labels, flat_tgt, all_tgt_boxes = [], [], [], []
    offset = 0
    for b, (src_idx, tgt_idx) in enumerate(indices):
        labels_b = tgt_ids[b]
        for s, t in zip(src_idx, tgt_idx):
            flat_src.append(b * Q + int(s))
            matched_labels.append(int(labels_b[int(t)]))
            flat_tgt.append(offset + int(t))
        boxes_b = jnp.asarray(targets[b]["boxes"], jnp.float32)
        all_tgt_boxes.append(boxes_b)
        offset += boxes_b.shape[0]

    flat_src = jnp.asarray(flat_src, jnp.int32)
    matched_labels = jnp.asarray(matched_labels, jnp.int32)
    flat_tgt = jnp.asarray(flat_tgt, jnp.int32)
    tgt_boxes_cat = jnp.concatenate(all_tgt_boxes, axis=0)

    full = _device_criterion(outputs["pred_logits"], outputs["pred_boxes"],
                             flat_src, matched_labels, flat_tgt, tgt_boxes_cat,
                             jnp.float32(num_boxes))

    out_losses = {}
    if "labels" in losses:
        out_losses["loss_ce"] = full["loss_ce"]
        out_losses["class_error"] = full["class_error"]
    if "boxes" in losses:
        out_losses["loss_bbox"] = full["loss_bbox"]
        out_losses["loss_giou"] = full["loss_giou"]
    # TODO(synk): 'masks' loss (nested tensors + bilinear interpolate),
    # contrastive/embedding losses (dict-driven host indexing), cardinality
    # logging metric and the Hungarian matcher are host-side / data-dependent
    # and not implemented as Pallas kernels.
    return out_losses


# --------------------------------- demo -------------------------------------
if __name__ == "__main__":
    key = jax.random.PRNGKey(0)
    B, Q, C1 = 2, 8, NUM_CLASSES + 1
    k1, k2, k3 = jax.random.split(key, 3)

    pred_logits = jax.random.normal(k1, (B, Q, C1), jnp.float32)
    pred_boxes = jax.nn.sigmoid(jax.random.normal(k2, (B, Q, 4), jnp.float32))

    # targets: 3 ground-truth boxes per image, boxes in normalized cxcywh
    tgt_labels = [[2, 5, 7], [1, 5, 11]]
    raw = jax.nn.sigmoid(jax.random.normal(k3, (B, 3, 4), jnp.float32))
    tgt_boxes = jnp.concatenate(
        [0.2 + 0.6 * raw[..., :2], 0.1 + 0.4 * raw[..., 2:]], axis=-1)
    targets = [{"labels": tgt_labels[b], "boxes": tgt_boxes[b]} for b in range(B)]

    outputs = {
        "pred_logits": pred_logits,
        "pred_boxes": pred_boxes,
        "select_id": [1, 2, 5, 7, 11],
    }

    # deterministic stand-in for the Hungarian matcher:
    # query {1,3,5} of each image matched to GT {0,1,2}
    indices = [([1, 3, 5], [0, 1, 2]), ([1, 3, 5], [0, 1, 2])]
    tgt_ids = [tgt_labels[0], tgt_labels[1]]
    matches = (indices, tgt_ids)

    losses = set_criterion_forward(outputs, targets, matches,
                                   losses=("labels", "boxes"))
    for v in losses.values():
        jax.block_until_ready(v)
    print("KERNEL_OK")
</pallas_src>

<mosaic_0001>
module attributes {stable_mosaic.version = 11 : i64} {
  func.func @_criterion_kernel(%arg0: i32, %arg1: memref<1xf32, #tpu.memory_space<smem>>, %arg2: memref<2xi32, #tpu.memory_space<smem>>, %arg3: memref<17x512xf32, #tpu.memory_space<vmem>>, %arg4: memref<1x512xi32, #tpu.memory_space<vmem>>, %arg5: memref<4x128xf32, #tpu.memory_space<vmem>>, %arg6: memref<4x128xf32, #tpu.memory_space<vmem>>, %arg7: memref<4xf32, #tpu.memory_space<smem>>, %arg8: memref<1x512xf32, #tpu.memory_space<vmem>>, %arg9: memref<1x512xf32, #tpu.memory_space<vmem>>, %arg10: memref<1x512xf32, #tpu.memory_space<vmem>>) attributes {dimension_semantics = [#tpu.dimension_semantics<arbitrary>], iteration_bounds = array<i64: 1>, scalar_prefetch = 2 : i64, scratch_operands = 3 : i64, tpu.core_type = #tpu.core_type<tc>, window_params = [{transform_indices = @transform_0, window_bounds = array<i64: 17, 512>}, {transform_indices = @transform_1, window_bounds = array<i64: 1, 512>}, {pipeline_mode = #tpu.pipeline_mode<synchronous>, transform_indices = @transform_2, window_bounds = array<i64: 4, 128>}, {pipeline_mode = #tpu.pipeline_mode<synchronous>, transform_indices = @transform_3, window_bounds = array<i64: 4, 128>}, {transform_indices = @transform_4, window_bounds = array<i64: 4>}]} {
    %c0 = arith.constant 0 : index
    %0 = memref.load %arg2[%c0] : memref<2xi32, #tpu.memory_space<smem>>
    %c0_i32 = arith.constant 0 : i32
    %1 = arith.cmpi eq, %arg0, %c0_i32 : i32
    %2 = arith.extui %1 : i1 to i32
    %c0_i32_0 = arith.constant 0 : i32
    %3 = arith.cmpi ne, %2, %c0_i32_0 : i32
    scf.if %3 {
      %cst_32 = arith.constant 0.000000e+00 : f32
      %80 = vector.broadcast %cst_32 : f32 to vector<1x512xf32>
      %c0_33 = arith.constant 0 : index
      %c0_34 = arith.constant 0 : index
      %81 = vector.load %arg8[%c0_33, %c0_34] : memref<1x512xf32, #tpu.memory_space<vmem>>, vector<1x512xf32>
      tpu.vector_store %arg8[%c0_33, %c0_34], %80 {strides = array<i32>} : memref<1x512xf32, #tpu.memory_space<vmem>>, vector<1x512xf32>,
      %cst_35 = arith.constant 0.000000e+00 : f32
      %82 = vector.broadcast %cst_35 : f32 to vector<1x512xf32>
      %c0_36 = arith.constant 0 : index
      %c0_37 = arith.constant 0 : index
      %83 = vector.load %arg9[%c0_36, %c0_37] : memref<1x512xf32, #tpu.memory_space<vmem>>, vector<1x512xf32>
      tpu.vector_store %arg9[%c0_36, %c0_37], %82 {strides = array<i32>} : memref<1x512xf32, #tpu.memory_space<vmem>>, vector<1x512xf32>,
      %cst_38 = arith.constant 0.000000e+00 : f32
      %84 = vector.broadcast %cst_38 : f32 to vector<1x512xf32>
      %c0_39 = arith.constant 0 : index
      %c0_40 = arith.constant 0 : index
      %85 = vector.load %arg10[%c0_39, %c0_40] : memref<1x512xf32, #tpu.memory_space<vmem>>, vector<1x512xf32>
      tpu.vector_store %arg10[%c0_39, %c0_40], %84 {strides = array<i32>} : memref<1x512xf32, #tpu.memory_space<vmem>>, vector<1x512xf32>,
    } else {
    }
    %c0_i32_1 = arith.constant 0 : i32
    %c512_i32 = arith.constant 512 : i32
    %4 = arith.muli %c0_i32_1, %c512_i32 : i32
    %5 = tpu.assume_multiple %4, 512 : i32
    %c0_2 = arith.constant 0 : index
    %6 = arith.index_cast %5 : i32 to index
    %7 = vector.load %arg3[%c0_2, %6] : memref<17x512xf32, #tpu.memory_space<vmem>>, vector<17x512xf32>
    %cst = arith.constant 14.2857141 : f32
    %8 = vector.broadcast %cst : f32 to vector<17x512xf32>
    %9 = arith.mulf %7, %8 : vector<17x512xf32>
    %c0_3 = arith.constant 0 : index
    %10 = arith.index_cast %5 : i32 to index
    %11 = vector.load %arg4[%c0_3, %10] : memref<1x512xi32, #tpu.memory_space<vmem>>, vector<1x512xi32>
    %12 = tpu.iota {dimensions = array<i32: 1>} : vector<1x512xi32>
    %c512_i32_4 = arith.constant 512 : i32
    %13 = arith.muli %arg0, %c512_i32_4 : i32
    %14 = vector.broadcast %13 : i32 to vector<1x512xi32>
    %15 = arith.addi %12, %14 : vector<1x512xi32>
    %16 = vector.broadcast %5 : i32 to vector<1x512xi32>
    %17 = arith.addi %15, %16 : vector<1x512xi32>
    %18 = vector.broadcast %0 : i32 to vector<1x512xi32>
    %19 = arith.cmpi slt, %17, %18 : vector<1x512xi32>
    %20 = arith.extui %19 : vector<1x512xi1> to vector<1x512xi32>
    %21 = arith.sitofp %20 : vector<1x512xi32> to vector<1x512xf32>
    %cst_5 = arith.constant 0.000000e+00 : f32
    %22 = vector.shape_cast %19 : vector<1x512xi1> to vector<1x512xi1>
    %23 = vector.broadcast %22 : vector<1x512xi1> to vector<17x512xi1>
    %24 = vector.broadcast %cst_5 : f32 to vector<17x512xf32>
    %25 = arith.select %23, %9, %24 : vector<17x512xi1>, vector<17x512xf32>
    %26 = tpu.iota {dimensions = array<i32: 0>} : vector<17x512xi32>
    %cst_6 = arith.constant dense<0xFF800000> : vector<512xf32>
    %27 = vector.multi_reduction <maximumf>, %25, %cst_6 [0] : vector<17x512xf32> to vector<512xf32>
    %28 = vector.shape_cast %27 : vector<512xf32> to vector<1x512xf32>
    %29 = vector.broadcast %28 : vector<1x512xf32> to vector<17x512xf32>
    %30 = arith.subf %25, %29 : vector<17x512xf32>
    %31 = math.exp %30 : vector<17x512xf32>
    %cst_7 = arith.constant dense<0.000000e+00> : vector<512xf32>
    %32 = vector.multi_reduction <add>, %31, %cst_7 [0] : vector<17x512xf32> to vector<512xf32>
    %33 = vector.shape_cast %32 : vector<512xf32> to vector<1x512xf32>
    %34 = math.log %33 : vector<1x512xf32>
    %35 = arith.addf %28, %34 : vector<1x512xf32>
    %36 = vector.broadcast %11 : vector<1x512xi32> to vector<17x512xi32>
    %37 = arith.cmpi eq, %26, %36 : vector<17x512xi32>
    %cst_8 = arith.constant 0.000000e+00 : f32
    %38 = vector.broadcast %cst_8 : f32 to vector<17x512xf32>
    %39 = arith.select %37, %25, %38 : vector<17x512xi1>, vector<17x512xf32>
    %cst_9 = arith.constant dense<0.000000e+00> : vector<512xf32>
    %40 = vector.multi_reduction <add>, %39, %cst_9 [0] : vector<17x512xf32> to vector<512xf32>
    %41 = vector.shape_cast %40 : vector<512xf32> to vector<1x512xf32>
    %42 = arith.subf %35, %41 : vector<1x512xf32>
    %43 = arith.negf %41 : vector<1x512xf32>
    %44 = math.exp %43 : vector<1x512xf32>
    %cst_10 = arith.constant 1.000000e+00 : f32
    %45 = vector.broadcast %cst_10 : f32 to vector<1x512xf32>
    %46 = arith.addf %45, %44 : vector<1x512xf32>
    %47 = arith.divf %45, %46 : vector<1x512xf32>
    %cst_11 = arith.constant 1.000000e+00 : f32
    %48 = vector.broadcast %cst_11 : f32 to vector<1x512xf32>
    %49 = arith.subf %48, %47 : vector<1x512xf32>
    %cst_12 = arith.constant 0.000000e+00 : f32
    %50 = vector.broadcast %cst_12 : f32 to vector<1x512xf32>
    %51 = arith.maximumf %49, %50 : vector<1x512xf32>
    %52 = math.sqrt %51 : vector<1x512xf32>
    %c16_i32 = arith.constant 16 : i32
    %53 = vector.broadcast %c16_i32 : i32 to vector<1x512xi32>
    %54 = arith.cmpi eq, %11, %53 : vector<1x512xi32>
    %cst_13 = arith.constant 1.000000e-01 : f32
    %cst_14 = arith.constant 1.000000e+00 : f32
    %55 = vector.broadcast %cst_13 : f32 to vector<1x512xf32>
    %56 = vector.broadcast %cst_14 : f32 to vector<1x512xf32>
    %57 = arith.select %54, %55, %56 : vector<1x512xi1>, vector<1x512xf32>
    %c0_15 = arith.constant 0 : index
    %c0_16 = arith.constant 0 : index
    %58 = vector.load %arg8[%c0_15, %c0_16] : memref<1x512xf32, #tpu.memory_space<vmem>>, vector<1x512xf32>
    %59 = arith.mulf %42, %52 : vector<1x512xf32>
    %60 = arith.mulf %59, %57 : vector<1x512xf32>
    %61 = arith.mulf %60, %21 : vector<1x512xf32>
    %62 = arith.addf %58, %61 : vector<1x512xf32>
    %c0_17 = arith.constant 0 : index
    %c0_18 = arith.constant 0 : index
    %63 = vector.load %arg8[%c0_17, %c0_18] : memref<1x512xf32, #tpu.memory_space<vmem>>, vector<1x512xf32>
    tpu.vector_store %arg8[%c0_17, %c0_18], %62 {strides = array<i32>} : memref<1x512xf32, #tpu.memory_space<vmem>>, vector<1x512xf32>,
    %c16_i32_19 = arith.constant 16 : i32
    %64 = vector.broadcast %c16_i32_19 : i32 to vector<1x512xi32>
    %65 = arith.cmpi ne, %11, %64 : vector<1x512xi32>
    %cst_20 = arith.constant 0.000000e+00 : f32
    %66 = vector.broadcast %cst_20 : f32 to vector<1x512xf32>
    %67 = arith.select %65, %21, %66 : vector<1x512xi1>, vector<1x512xf32>
    %68 = arith.cmpf oge, %41, %28 : vector<1x512xf32>
    %cst_21 = arith.constant 0.000000e+00 : f32
    %69 = vector.broadcast %cst_21 : f32 to vector<1x512xf32>
    %70 = arith.select %68, %67, %69 : vector<1x512xi1>, vector<1x512xf32>
    %c0_22 = arith.constant 0 : index
    %c0_23 = arith.constant 0 : index
    %71 = vector.load %arg9[%c0_22, %c0_23] : memref<1x512xf32, #tpu.memory_space<vmem>>, vector<1x512xf32>
    %72 = arith.addf %71, %70 : vector<1x512xf32>
    %c0_24 = arith.constant 0 : index
    %c0_25 = arith.constant 0 : index
    %73 = vector.load %arg9[%c0_24, %c0_25] : memref<1x512xf32, #tpu.memory_space<vmem>>, vector<1x512xf32>
    tpu.vector_store %arg9[%c0_24, %c0_25], %72 {strides = array<i32>} : memref<1x512xf32, #tpu.memory_space<vmem>>, vector<1x512xf32>,
    %c0_26 = arith.constant 0 : index
    %c0_27 = arith.constant 0 : index
    %74 = vector.load %arg10[%c0_26, %c0_27] : memref<1x512xf32, #tpu.memory_space<vmem>>, vector<1x512xf32>
    %75 = arith.addf %74, %67 : vector<1x512xf32>
    %c0_28 = arith.constant 0 : index
    %c0_29 = arith.constant 0 : index
    %76 = vector.load %arg10[%c0_28, %c0_29] : memref<1x512xf32, #tpu.memory_space<vmem>>, vector<1x512xf32>
    tpu.vector_store %arg10[%c0_28, %c0_29], %75 {strides = array<i32>} : memref<1x512xf32, #tpu.memory_space<vmem>>, vector<1x512xf32>,
    %c1_i32 = arith.constant 1 : i32
    %c0_i32_30 = arith.constant 0 : i32
    %77 = arith.cmpi eq, %arg0, %c0_i32_30 : i32
    %78 = arith.extui %77 : i1 to i32
    %c0_i32_31 = arith.constant 0 : i32
    %79 = arith.cmpi ne, %78, %c0_i32_31 : i32
    scf.if %79 {
      %c0_32 = arith.constant 0 : index
      %c0_33 = arith.constant 0 : index
      %80 = vector.load %arg5[%c0_32, %c0_33] : memref<4x128xf32, #tpu.memory_space<vmem>>, vector<4x128xf32>
      %c0_34 = arith.constant 0 : index
      %c0_35 = arith.constant 0 : index
      %81 = vector.load %arg6[%c0_34, %c0_35] : memref<4x128xf32, #tpu.memory_space<vmem>>, vector<4x128xf32>
      %82 = tpu.iota {dimensions = array<i32: 1>} : vector<1x128xi32>
      %c1 = arith.constant 1 : index
      %83 = memref.load %arg2[%c1] : memref<2xi32, #tpu.memory_space<smem>>
      %84 = vector.broadcast %83 : i32 to vector<1x128xi32>
      %85 = arith.cmpi slt, %82, %84 : vector<1x128xi32>
      %86 = arith.extui %85 : vector<1x128xi1> to vector<1x128xi32>
      %87 = arith.sitofp %86 : vector<1x128xi32> to vector<1x128xf32>
      %88 = arith.subf %80, %81 : vector<4x128xf32>
      %89 = math.absf %88 : vector<4x128xf32>
      %90 = vector.broadcast %87 : vector<1x128xf32> to vector<4x128xf32>
      %91 = arith.mulf %89, %90 : vector<4x128xf32>
      %92 = vector.shape_cast %91 : vector<4x128xf32> to vector<1x4x128xf32>
      %cst_36 = arith.constant dense<0.000000e+00> : vector<1xf32>
      %93 = vector.multi_reduction <add>, %92, %cst_36 [1, 2] : vector<1x4x128xf32> to vector<1xf32>
      %94 = vector.shape_cast %93 : vector<1xf32> to vector<1x1x1xf32>
      %95 = vector.extract %94[0, 0, 0] : f32 from vector<1x1x1xf32>
      %96 = vector.extract_strided_slice %80 {offsets = [0, 0], sizes = [1, 128], strides = [1, 1]} : vector<4x128xf32> to vector<1x128xf32>
      %97 = vector.extract_strided_slice %80 {offsets = [1, 0], sizes = [1, 128], strides = [1, 1]} : vector<4x128xf32> to vector<1x128xf32>
      %98 = vector.extract_strided_slice %80 {offsets = [2, 0], sizes = [1, 128], strides = [1, 1]} : vector<4x128xf32> to vector<1x128xf32>
      %99 = vector.extract_strided_slice %80 {offsets = [3, 0], sizes = [1, 128], strides = [1, 1]} : vector<4x128xf32> to vector<1x128xf32>
      %cst_37 = arith.constant 5.000000e-01 : f32
      %100 = vector.broadcast %cst_37 : f32 to vector<1x128xf32>
      %101 = arith.mulf %100, %98 : vector<1x128xf32>
      %102 = arith.subf %96, %101 : vector<1x128xf32>
      %cst_38 = arith.constant 5.000000e-01 : f32
      %103 = vector.broadcast %cst_38 : f32 to vector<1x128xf32>
      %104 = arith.mulf %103, %99 : vector<1x128xf32>
      %105 = arith.subf %97, %104 : vector<1x128xf32>
      %cst_39 = arith.constant 5.000000e-01 : f32
      %106 = vector.broadcast %cst_39 : f32 to vector<1x128xf32>
      %107 = arith.mulf %106, %98 : vector<1x128xf32>
      %108 = arith.addf %96, %107 : vector<1x128xf32>
      %cst_40 = arith.constant 5.000000e-01 : f32
      %109 = vector.broadcast %cst_40 : f32 to vector<1x128xf32>
      %110 = arith.mulf %109, %99 : vector<1x128xf32>
      %111 = arith.addf %97, %110 : vector<1x128xf32>
      %112 = vector.extract_strided_slice %81 {offsets = [0, 0], sizes = [1, 128], strides = [1, 1]} : vector<4x128xf32> to vector<1x128xf32>
      %113 = vector.extract_strided_slice %81 {offsets = [1, 0], sizes = [1, 128], strides = [1, 1]} : vector<4x128xf32> to vector<1x128xf32>
      %114 = vector.extract_strided_slice %81 {offsets = [2, 0], sizes = [1, 128], strides = [1, 1]} : vector<4x128xf32> to vector<1x128xf32>
      %115 = vector.extract_strided_slice %81 {offsets = [3, 0], sizes = [1, 128], strides = [1, 1]} : vector<4x128xf32> to vector<1x128xf32>
      %cst_41 = arith.constant 5.000000e-01 : f32
      %116 = vector.broadcast %cst_41 : f32 to vector<1x128xf32>
      %117 = arith.mulf %116, %114 : vector<1x128xf32>
      %118 = arith.subf %112, %117 : vector<1x128xf32>
      %cst_42 = arith.constant 5.000000e-01 : f32
      %119 = vector.broadcast %cst_42 : f32 to vector<1x128xf32>
      %120 = arith.mulf %119, %115 : vector<1x128xf32>
      %121 = arith.subf %113, %120 : vector<1x128xf32>
      %cst_43 = arith.constant 5.000000e-01 : f32
      %122 = vector.broadcast %cst_43 : f32 to vector<1x128xf32>
      %123 = arith.mulf %122, %114 : vector<1x128xf32>
      %124 = arith.addf %112, %123 : vector<1x128xf32>
      %cst_44 = arith.constant 5.000000e-01 : f32
      %125 = vector.broadcast %cst_44 : f32 to vector<1x128xf32>
      %126 = arith.mulf %125, %115 : vector<1x128xf32>
      %127 = arith.addf %113, %126 : vector<1x128xf32>
      %128 = arith.subf %108, %102 : vector<1x128xf32>
      %129 = arith.subf %111, %105 : vector<1x128xf32>
      %130 = arith.mulf %128, %129 : vector<1x128xf32>
      %131 = arith.subf %124, %118 : vector<1x128xf32>
      %132 = arith.subf %127, %121 : vector<1x128xf32>
      %133 = arith.mulf %131, %132 : vector<1x128xf32>
      %134 = arith.maximumf %102, %118 : vector<1x128xf32>
      %135 = arith.maximumf %105, %121 : vector<1x128xf32>
      %136 = arith.minimumf %108, %124 : vector<1x128xf32>
      %137 = arith.minimumf %111, %127 : vector<1x128xf32>
      %138 = arith.subf %136, %134 : vector<1x128xf32>
      %cst_45 = arith.constant 0.000000e+00 : f32
      %139 = vector.broadcast %cst_45 : f32 to vector<1x128xf32>
      %140 = arith.maximumf %138, %139 : vector<1x128xf32>
      %141 = arith.subf %137, %135 : vector<1x128xf32>
      %cst_46 = arith.constant 0.000000e+00 : f32
      %142 = vector.broadcast %cst_46 : f32 to vector<1x128xf32>
      %143 = arith.maximumf %141, %142 : vector<1x128xf32>
      %144 = arith.mulf %140, %143 : vector<1x128xf32>
      %145 = arith.addf %130, %133 : vector<1x128xf32>
      %146 = arith.subf %145, %144 : vector<1x128xf32>
      %cst_47 = arith.constant 0.000000e+00 : f32
      %147 = vector.broadcast %cst_47 : f32 to vector<1x128xf32>
      %148 = arith.cmpf ogt, %87, %147 : vector<1x128xf32>
      %cst_48 = arith.constant 1.000000e+00 : f32
      %149 = vector.broadcast %cst_48 : f32 to vector<1x128xf32>
      %150 = arith.select %148, %146, %149 : vector<1x128xi1>, vector<1x128xf32>
      %151 = arith.divf %144, %150 : vector<1x128xf32>
      %152 = arith.minimumf %102, %118 : vector<1x128xf32>
      %153 = arith.minimumf %105, %121 : vector<1x128xf32>
      %154 = arith.maximumf %108, %124 : vector<1x128xf32>
      %155 = arith.maximumf %111, %127 : vector<1x128xf32>
      %156 = arith.subf %154, %152 : vector<1x128xf32>
      %cst_49 = arith.constant 0.000000e+00 : f32
      %157 = vector.broadcast %cst_49 : f32 to vector<1x128xf32>
      %158 = arith.maximumf %156, %157 : vector<1x128xf32>
      %159 = arith.subf %155, %153 : vector<1x128xf32>
      %cst_50 = arith.constant 0.000000e+00 : f32
      %160 = vector.broadcast %cst_50 : f32 to vector<1x128xf32>
      %161 = arith.maximumf %159, %160 : vector<1x128xf32>
      %162 = arith.mulf %158, %161 : vector<1x128xf32>
      %cst_51 = arith.constant 0.000000e+00 : f32
      %163 = vector.broadcast %cst_51 : f32 to vector<1x128xf32>
      %164 = arith.cmpf ogt, %87, %163 : vector<1x128xf32>
      %cst_52 = arith.constant 1.000000e+00 : f32
      %165 = vector.broadcast %cst_52 : f32 to vector<1x128xf32>
      %166 = arith.select %164, %162, %165 : vector<1x128xi1>, vector<1x128xf32>
      %167 = arith.subf %162, %146 : vector<1x128xf32>
      %168 = arith.divf %167, %166 : vector<1x128xf32>
      %169 = arith.subf %151, %168 : vector<1x128xf32>
      %cst_53 = arith.constant 1.000000e+00 : f32
      %170 = vector.broadcast %cst_53 : f32 to vector<1x128xf32>
      %171 = arith.subf %170, %169 : vector<1x128xf32>
      %172 = arith.mulf %171, %87 : vector<1x128xf32>
      %173 = vector.shape_cast %172 : vector<1x128xf32> to vector<1x1x128xf32>
      %cst_54 = arith.constant dense<0.000000e+00> : vector<1xf32>
      %174 = vector.multi_reduction <add>, %173, %cst_54 [1, 2] : vector<1x1x128xf32> to vector<1xf32>
      %175 = vector.shape_cast %174 : vector<1xf32> to vector<1x1x1xf32>
      %176 = vector.extract %175[0, 0, 0] : f32 from vector<1x1x1xf32>
      %c0_55 = arith.constant 0 : index
      %c0_56 = arith.constant 0 : index
      %177 = vector.load %arg8[%c0_55, %c0_56] : memref<1x512xf32, #tpu.memory_space<vmem>>, vector<1x512xf32>
      %178 = vector.shape_cast %177 : vector<1x512xf32> to vector<1x1x512xf32>
      %cst_57 = arith.constant dense<0.000000e+00> : vector<1xf32>
      %179 = vector.multi_reduction <add>, %178, %cst_57 [1, 2] : vector<1x1x512xf32> to vector<1xf32>
      %180 = vector.shape_cast %179 : vector<1xf32> to vector<1x1x1xf32>
      %181 = vector.extract %180[0, 0, 0] : f32 from vector<1x1x1xf32>
      %c0_58 = arith.constant 0 : index
      %c0_59 = arith.constant 0 : index
      %182 = vector.load %arg9[%c0_58, %c0_59] : memref<1x512xf32, #tpu.memory_space<vmem>>, vector<1x512xf32>
      %183 = vector.shape_cast %182 : vector<1x512xf32> to vector<1x1x512xf32>
      %cst_60 = arith.constant dense<0.000000e+00> : vector<1xf32>
      %184 = vector.multi_reduction <add>, %183, %cst_60 [1, 2] : vector<1x1x512xf32> to vector<1xf32>
      %185 = vector.shape_cast %184 : vector<1xf32> to vector<1x1x1xf32>
      %186 = vector.extract %185[0, 0, 0] : f32 from vector<1x1x1xf32>
      %c0_61 = arith.constant 0 : index
      %c0_62 = arith.constant 0 : index
      %187 = vector.load %arg10[%c0_61, %c0_62] : memref<1x512xf32, #tpu.memory_space<vmem>>, vector<1x512xf32>
      %188 = vector.shape_cast %187 : vector<1x512xf32> to vector<1x1x512xf32>
      %cst_63 = arith.constant dense<0.000000e+00> : vector<1xf32>
      %189 = vector.multi_reduction <add>, %188, %cst_63 [1, 2] : vector<1x1x512xf32> to vector<1xf32>
      %190 = vector.shape_cast %189 : vector<1xf32> to vector<1x1x1xf32>
      %191 = vector.extract %190[0, 0, 0] : f32 from vector<1x1x1xf32>
      %c0_64 = arith.constant 0 : index
      %192 = memref.load %arg1[%c0_64] : memref<1xf32, #tpu.memory_space<smem>>
      %cst_65 = arith.constant 1.000000e+00 : f32
      %193 = arith.maximumf %191, %cst_65 : f32
      %194 = arith.divf %181, %192 : f32
      %c0_66 = arith.constant 0 : index
      %195 = memref.load %arg7[%c0_66] : memref<4xf32, #tpu.memory_space<smem>>
      memref.store %194, %arg7[%c0_66] : memref<4xf32, #tpu.memory_space<smem>>
      %cst_67 = arith.constant 1.000000e+02 : f32
      %196 = arith.mulf %cst_67, %186 : f32
      %197 = arith.divf %196, %193 : f32
      %cst_68 = arith.constant 1.000000e+02 : f32
      %198 = arith.subf %cst_68, %197 : f32
      %c1_69 = arith.constant 1 : index
      %199 = memref.load %arg7[%c1_69] : memref<4xf32, #tpu.memory_space<smem>>
      memref.store %198, %arg7[%c1_69] : memref<4xf32, #tpu.memory_space<smem>>
      %200 = arith.divf %95, %192 : f32
      %c2 = arith.constant 2 : index
      %201 = memref.load %arg7[%c2] : memref<4xf32, #tpu.memory_space<smem>>
      memref.store %200, %arg7[%c2] : memref<4xf32, #tpu.memory_space<smem>>
      %202 = arith.divf %176, %192 : f32
      %c3 = arith.constant 3 : index
      %203 = memref.load %arg7[%c3] : memref<4xf32, #tpu.memory_space<smem>>
      memref.store %202, %arg7[%c3] : memref<4xf32, #tpu.memory_space<smem>>
    } else {
    }
    return
  }
  func.func @transform_0(%arg0: i32, %arg1: memref<1xf32, #tpu.memory_space<smem>>, %arg2: memref<2xi32, #tpu.memory_space<smem>>) -> (i32, i32) {
    %c0_i32 = arith.constant 0 : i32
    %c0_i32_0 = arith.constant 0 : i32
    return %c0_i32, %arg0 : i32, i32
  }
  func.func @transform_1(%arg0: i32, %arg1: memref<1xf32, #tpu.memory_space<smem>>, %arg2: memref<2xi32, #tpu.memory_space<smem>>) -> (i32, i32) {
    %c0_i32 = arith.constant 0 : i32
    %c0_i32_0 = arith.constant 0 : i32
    return %c0_i32, %arg0 : i32, i32
  }
  func.func @transform_2(%arg0: i32, %arg1: memref<1xf32, #tpu.memory_space<smem>>, %arg2: memref<2xi32, #tpu.memory_space<smem>>) -> (i32, i32) {
    %c0_i32 = arith.constant 0 : i32
    %c0_i32_0 = arith.constant 0 : i32
    %c0_i32_1 = arith.constant 0 : i32
    return %c0_i32, %c0_i32_0 : i32, i32
  }
  func.func @transform_3(%arg0: i32, %arg1: memref<1xf32, #tpu.memory_space<smem>>, %arg2: memref<2xi32, #tpu.memory_space<smem>>) -> (i32, i32) {
    %c0_i32 = arith.constant 0 : i32
    %c0_i32_0 = arith.constant 0 : i32
    %c0_i32_1 = arith.constant 0 : i32
    return %c0_i32, %c0_i32_0 : i32, i32
  }
  func.func @transform_4(%arg0: i32, %arg1: memref<1xf32, #tpu.memory_space<smem>>, %arg2: memref<2xi32, #tpu.memory_space<smem>>) -> i32 {
    %c0_i32 = arith.constant 0 : i32
    %c0_i32_0 = arith.constant 0 : i32
    return %c0_i32 : i32
  }
}

</mosaic_0001>

<llo_original>
// kernel: _device_criterion.1
$region0: #{_device_criterion.1}
  #allocation0 [shape = 'u32[]', space=smem, size = 0x4, offset = 0x4, fixed_abs, tag = 'smem constant byte address 0x4 - core index']
  #allocation1 [shape = 'u32[72,128]{1,0:T(1,128)}', space=vmem, size = 0x9000, scoped, tag = 'internal scratch']
  #allocation2 [shape = 'f32[1,512]{1,0:T(1,128)}', space=vmem, size = 0x800, scoped, tag = 'scratch operand']
  #allocation3 [shape = 'f32[1,512]{1,0:T(1,128)}', space=vmem, size = 0x800, scoped, tag = 'scratch operand']
  #allocation4 [shape = 'f32[1,512]{1,0:T(1,128)}', space=vmem, size = 0x800, scoped, tag = 'scratch operand']
  #allocation5 [shape = 's32[1]{0}', space=sflag, size = 0x4, scoped, tag = 'scoped memory for _device_criterion.1']
  #allocation6 [shape = 'f32[1]{0:T(128)S(6)}', space=smem, size = 0x200, scoped, tag = 'prefetched SMEM operand 0']
  #allocation7 [shape = 'u8[512]{0}', space=smem, size = 0x200, scoped, tag = 'prefetched SMEM operand 1']
  %s0 = inlined_call_operand.<no memory space> [shape: f32[1], index: 0, kind: input, shape index: {}]
  %s1 = inlined_call_operand.vmem [shape: s32[2], index: 1, kind: input, shape index: {}]
  %s2 = inlined_call_operand.vmem [shape: f32[17,512], index: 2, kind: input, shape index: {}]
  %s3 = inlined_call_operand.vmem [shape: s32[1,512], index: 3, kind: input, shape index: {}]
  %s4 = inlined_call_operand.vmem [shape: f32[4,128], index: 4, kind: input, shape index: {}]
  %s5 = inlined_call_operand.vmem [shape: f32[4,128], index: 5, kind: input, shape index: {}]
  %s6 = inlined_call_operand.vmem [shape: f32[4], index: 6, kind: output, shape index: {}]
  %s7 = sld [smem:[#allocation0]]
  $region34: #{_device_criterion.1} parent=0
    _
  %s9 = ssub.s32 1, %s7
  %s10 = scalar_select 0, %s9, %s7
  %11 = sst [smem:[#allocation6]] %s0
  %s13 = sshll.u32 %s1, 4
  %s14 = int_to_ptr.vmem [resolvable:$true] %s13
  %16 = dma.vmem_to_smem %s14, 16, [#allocation7], [#allocation5]
  %18 = dma.done [#allocation5], 16
  %19 = sfence
  $region1: #{_device_criterion.1} parent=0
    #allocation8 [shape = 'u8[512]{0}', space=smem, size = 0x200, scoped, tag = 'output window, operand 0, single buffered']
    #allocation9 [shape = 's32[1]{0}', space=sflag, size = 0x4, scoped, tag = 'scoped memory for _device_criterion.1']
    %20 = vsyncpa [#allocation9], 0
    // Predicated region
    $region2: #{_device_criterion.1} parent=1 // pred_check
      _
    $region3: #{_device_criterion.1} parent=1 // pred_check_branch
      %22 = sbr.rel (0) target = $region5
    $region4: #{_device_criterion.1} parent=1 // pred_region
      _
    $region5: #{_device_criterion.1} parent=1 // pred_fallthru
      _
    // Predicated region
    $region6: #{_device_criterion.1} parent=1 // pred_check
      _
    $region7: #{_device_criterion.1} parent=1 // pred_check_branch
      %24 = sbr.rel (0) target = $region9
    $region8: #{_device_criterion.1} parent=1 // pred_region
      _
    $region9: #{_device_criterion.1} parent=1 // pred_fallthru
      _
    // Predicated region
    $region10: #{_device_criterion.1} parent=1 // pred_check
      _
    $region11: #{_device_criterion.1} parent=1 // pred_check_branch
      %26 = sbr.rel (0) target = $region13
    $region12: #{_device_criterion.1} parent=1 // pred_region
      _
    $region13: #{_device_criterion.1} parent=1 // pred_fallthru
      _
    // Predicated region
    $region14: #{_device_criterion.1} parent=1 // pred_check
      _
    $region15: #{_device_criterion.1} parent=1 // pred_check_branch
      %28 = sbr.rel (0) target = $region17
    $region16: #{_device_criterion.1} parent=1 // pred_region
      _
    $region17: #{_device_criterion.1} parent=1 // pred_fallthru
      _
    %s29 = sld [smem:[#allocation7]]
    %p30 = scmp.eq.s32.totalorder 0, 0
    // Predicated region
    $region18: #{_device_criterion.1} parent=1 // pred_check
      %p31 = pneg %p30
    $region19: #{_device_criterion.1} parent=1 // pred_check_branch
      %33 = sbr.rel (%p31) target = $region21
    $region20: #{_device_criterion.1} parent=1 // pred_region
      %v34 = vlaneseq
      %vm35 = vcmp.ge.s32.totalorder %v34, 0
      %vm36 = vcmp.lt.s32.totalorder %v34, 512
      %vm37 = vmand %vm35, %vm36
      %38 = vst.msk [vmem:[#allocation2] sm:$0xf] %vm37, 0.0
      %39 = vst.msk [vmem:[#allocation3] sm:$0xf] %vm37, 0.0
      %40 = vst.msk [vmem:[#allocation4] sm:$0xf] %vm37, 0.0
    $region21: #{_device_criterion.1} parent=1 // pred_fallthru
      _
    %v41 = vld [vmem:[%s2] sm:$0xff]
    %v42 = vld [vmem:[%s2 + $0x8] sm:$0xff]
    %v43 = vld [vmem:[%s2 + $0x10] sm:$0xff]
    %v44 = vld [vmem:[%s2 + $0x18] sm:$0xff]
    %v45 = vld [vmem:[%s2 + $0x20] sm:$0xff]
    %v46 = vld [vmem:[%s2 + $0x28] sm:$0xff]
    %v47 = vld [vmem:[%s2 + $0x30] sm:$0xff]
    %v48 = vld [vmem:[%s2 + $0x38] sm:$0xff]
    %v49 = vld [vmem:[%s2 + $0x40] sm:$0x1]
    %v50 = vld [vmem:[%s2 + $0x48] sm:$0x1]
    %v51 = vld [vmem:[%s2 + $0x50] sm:$0x1]
    %v52 = vld [vmem:[%s2 + $0x58] sm:$0x1]
    %v53 = vmul.f32 %v41, 14.285714
    %v54 = vmul.f32 %v42, 14.285714
    %v55 = vmul.f32 %v43, 14.285714
    %v56 = vmul.f32 %v44, 14.285714
    %v57 = vmul.f32 %v45, 14.285714
    %v58 = vmul.f32 %v46, 14.285714
    %v59 = vmul.f32 %v47, 14.285714
    %v60 = vmul.f32 %v48, 14.285714
    %v61 = vmul.f32 %v49, 14.285714
    %v62 = vmul.f32 %v50, 14.285714
    %v63 = vmul.f32 %v51, 14.285714
    %v64 = vmul.f32 %v52, 14.285714
    %v65 = vld [vmem:[%s3] sm:$0xf]
    %v66 = vlaneseq
    %v67 = vand.u32 %v66, 127
    %v68 = vadd.s32 %v67, 128
    %v69 = vadd.s32 %v67, 256
    %v70 = vadd.s32 %v67, 384
    %s71 = smul.u32 0, 512
    %v72 = vstv %s71
    %v73 = vadd.s32 %v67, %v72
    %v74 = vadd.s32 %v68, %v72
    %v75 = vadd.s32 %v69, %v72
    %v76 = vadd.s32 %v70, %v72
    %v77 = vstv 0
    %v78 = vadd.s32 %v73, %v77
    %v79 = vadd.s32 %v74, %v77
    %v80 = vadd.s32 %v75, %v77
    %v81 = vadd.s32 %v76, %v77
    %v82 = vstv %s29
    %vm83 = vcmp.lt.s32.totalorder %v78, %v82
    %vm84 = vcmp.lt.s32.totalorder %v79, %v82
    %vm85 = vcmp.lt.s32.totalorder %v80, %v82
    %vm86 = vcmp.lt.s32.totalorder %v81, %v82
    %v87 = vsel %vm83, 1, 0
    %v88 = vsel %vm84, 1, 0
    %v89 = vsel %vm85, 1, 0
    %v90 = vsel %vm86, 1, 0
    %v91 = vcvt.s32.f32 %v87
    %v92 = vcvt.s32.f32 %v88
    %v93 = vcvt.s32.f32 %v89
    %v94 = vcvt.s32.f32 %v90
    %vm95 = vcmp.eq.s32.totalorder %v87, 1
    %vm96 = vcmp.eq.s32.totalorder %v88, 1
    %vm97 = vcmp.eq.s32.totalorder %v89, 1
    %vm98 = vcmp.eq.s32.totalorder %v90, 1
    %v99 = vsel %vm95, %v53, 0.0
    %v100 = vsel %vm96, %v54, 0.0
    %v101 = vsel %vm97, %v55, 0.0
    %v102 = vsel %vm98, %v56, 0.0
    %v103 = vsel %vm95, %v57, 0.0
    %v104 = vsel %vm96, %v58, 0.0
    %v105 = vsel %vm97, %v59, 0.0
    %v106 = vsel %vm98, %v60, 0.0
    %v107 = vsel %vm95, %v61, 0.0
    %v108 = vsel %vm96, %v62, 0.0
    %v109 = vsel %vm97, %v63, 0.0
    %v110 = vsel %vm98, %v64, 0.0
    %v111 = vlaneseq
    %v112 = vshrl.u32 %v111, 7
    %v113 = vadd.s32 %v112, 8
    %v114 = vadd.s32 %v112, 16
    %v115 = vmax.f32 %v99, %v103
    %vm116 = vcmask 1040384
    %v117 = vsel %vm116, %v107, -inf
    %v118 = vmax.f32 %v115, %v117
    %v119 = vrot.slane %v118, 4
    %v120 = vmax.f32 %v118, %v119
    %v121 = vrot.slane %v120, 2
    %v122 = vmax.f32 %v120, %v121
    %v123 = vrot.slane %v122, 1
    %v124 = vmax.f32 %v122, %v123
    %v125 = vmax.f32 %v100, %v104
    %v126 = vsel %vm116, %v108, -inf
    %v127 = vmax.f32 %v125, %v126
    %v128 = vrot.slane %v127, 4
    %v129 = vmax.f32 %v127, %v128
    %v130 = vrot.slane %v129, 2
    %v131 = vmax.f32 %v129, %v130
    %v132 = vrot.slane %v131, 1
    %v133 = vmax.f32 %v131, %v132
    %v134 = vmax.f32 %v101, %v105
    %v135 = vsel %vm116, %v109, -inf
    %v136 = vmax.f32 %v134, %v135
    %v137 = vrot.slane %v136, 4
    %v138 = vmax.f32 %v136, %v137
    %v139 = vrot.slane %v138, 2
    %v140 = vmax.f32 %v138, %v139
    %v141 = vrot.slane %v140, 1
    %v142 = vmax.f32 %v140, %v141
    %v143 = vmax.f32 %v102, %v106
    %v144 = vsel %vm116, %v110, -inf
    %v145 = vmax.f32 %v143, %v144
    %v146 = vrot.slane %v145, 4
    %v147 = vmax.f32 %v145, %v146
    %v148 = vrot.slane %v147, 2
    %v149 = vmax.f32 %v147, %v148
    %v150 = vrot.slane %v149, 1
    %v151 = vmax.f32 %v149, %v150
    %v152 = vsub.f32 %v99, %v124
    %v153 = vsub.f32 %v100, %v133
    %v154 = vsub.f32 %v101, %v142
    %v155 = vsub.f32 %v102, %v151
    %v156 = vsub.f32 %v103, %v124
    %v157 = vsub.f32 %v104, %v133
    %v158 = vsub.f32 %v105, %v142
    %v159 = vsub.f32 %v106, %v151
    %v160 = vsub.f32 %v107, %v124
    %v161 = vsub.f32 %v108, %v133
    %v162 = vsub.f32 %v109, %v142
    %v163 = vsub.f32 %v110, %v151
    %v164 = vmul.f32 %v152, 1.442695
    %v165 = vpow.pop %v164
    %v166 = vmul.f32 %v153, 1.442695
    %v167 = vpow.pop %v166
    %v168 = vmul.f32 %v154, 1.442695
    %v169 = vpow.pop %v168
    %v170 = vmul.f32 %v155, 1.442695
    %v171 = vpow.pop %v170
    %v172 = vmul.f32 %v156, 1.442695
    %v173 = vpow.pop %v172
    %v174 = vmul.f32 %v157, 1.442695
    %v175 = vpow.pop %v174
    %v176 = vmul.f32 %v158, 1.442695
    %v177 = vpow.pop %v176
    %v178 = vmul.f32 %v159, 1.442695
    %v179 = vpow.pop %v178
    %v180 = vmul.f32 %v160, 1.442695
    %v181 = vpow.pop %v180
    %v182 = vmul.f32 %v161, 1.442695
    %v183 = vpow.pop %v182
    %v184 = vmul.f32 %v162, 1.442695
    %v185 = vpow.pop %v184
    %v186 = vmul.f32 %v163, 1.442695
    %v187 = vpow.pop %v186
    %v188 = vadd.f32 %v165, %v173
    %v189 = vsel %vm116, %v181, 0.0
    %v190 = vadd.f32 %v188, %v189
    %v191 = vrot.slane %v190, 4
    %v192 = vadd.f32 %v190, %v191
    %v193 = vrot.slane %v192, 2
    %v194 = vadd.f32 %v192, %v193
    %v195 = vrot.slane %v194, 1
    %v196 = vadd.f32 %v194, %v195
    %v197 = vadd.f32 %v167, %v175
    %v198 = vsel %vm116, %v183, 0.0
    %v199 = vadd.f32 %v197, %v198
    %v200 = vrot.slane %v199, 4
    %v201 = vadd.f32 %v199, %v200
    %v202 = vrot.slane %v201, 2
    %v203 = vadd.f32 %v201, %v202
    %v204 = vrot.slane %v203, 1
    %v205 = vadd.f32 %v203, %v204
    %v206 = vadd.f32 %v169, %v177
    %v207 = vsel %vm116, %v185, 0.0
    %v208 = vadd.f32 %v206, %v207
    %v209 = vrot.slane %v208, 4
    %v210 = vadd.f32 %v208, %v209
    %v211 = vrot.slane %v210, 2
    %v212 = vadd.f32 %v210, %v211
    %v213 = vrot.slane %v212, 1
    %v214 = vadd.f32 %v212, %v213
    %v215 = vadd.f32 %v171, %v179
    %v216 = vsel %vm116, %v187, 0.0
    %v217 = vadd.f32 %v215, %v216
    %v218 = vrot.slane %v217, 4
    %v219 = vadd.f32 %v217, %v218
    %v220 = vrot.slane %v219, 2
    %v221 = vadd.f32 %v219, %v220
    %v222 = vrot.slane %v221, 1
    %v223 = vadd.f32 %v221, %v222
    %v224 = vlog2.pop %v196
    %v225 = vmul.f32 %v224, 0.6931472
    %v226 = vlog2.pop %v205
    %v227 = vmul.f32 %v226, 0.6931472
    %v228 = vlog2.pop %v214
    %v229 = vmul.f32 %v228, 0.6931472
    %v230 = vlog2.pop %v223
    %v231 = vmul.f32 %v230, 0.6931472
    %v232 = vadd.f32 %v124, %v225
    %v233 = vadd.f32 %v133, %v227
    %v234 = vadd.f32 %v142, %v229
    %v235 = vadd.f32 %v151, %v231
    %v236 = vperm.slane %v65, 0
    %v237 = vperm.slane %v65, 1
    %v238 = vperm.slane %v65, 2
    %v239 = vperm.slane %v65, 3
    %vm240 = vcmp.eq.s32.totalorder %v112, %v236
    %vm241 = vcmp.eq.s32.totalorder %v112, %v237
    %vm242 = vcmp.eq.s32.totalorder %v112, %v238
    %vm243 = vcmp.eq.s32.totalorder %v112, %v239
    %vm244 = vcmp.eq.s32.totalorder %v113, %v236
    %vm245 = vcmp.eq.s32.totalorder %v113, %v237
    %vm246 = vcmp.eq.s32.totalorder %v113, %v238
    %vm247 = vcmp.eq.s32.totalorder %v113, %v239
    %vm248 = vcmp.eq.s32.totalorder %v114, %v236
    %vm249 = vcmp.eq.s32.totalorder %v114, %v237
    %vm250 = vcmp.eq.s32.totalorder %v114, %v238
    %vm251 = vcmp.eq.s32.totalorder %v114, %v239
    %v252 = vsel %vm240, %v99, 0.0
    %v253 = vsel %vm241, %v100, 0.0
    %v254 = vsel %vm242, %v101, 0.0
    %v255 = vsel %vm243, %v102, 0.0
    %v256 = vsel %vm244, %v103, 0.0
    %v257 = vsel %vm245, %v104, 0.0
    %v258 = vsel %vm246, %v105, 0.0
    %v259 = vsel %vm247, %v106, 0.0
    %v260 = vsel %vm248, %v107, 0.0
    %v261 = vsel %vm249, %v108, 0.0
    %v262 = vsel %vm250, %v109, 0.0
    %v263 = vsel %vm251, %v110, 0.0
    %v264 = vadd.f32 %v252, %v256
    %v265 = vsel %vm116, %v260, 0.0
    %v266 = vadd.f32 %v264, %v265
    %v267 = vrot.slane %v266, 4
    %v268 = vadd.f32 %v266, %v267
    %v269 = vrot.slane %v268, 2
    %v270 = vadd.f32 %v268, %v269
    %v271 = vrot.slane %v270, 1
    %v272 = vadd.f32 %v270, %v271
    %v273 = vadd.f32 %v253, %v257
    %v274 = vsel %vm116, %v261, 0.0
    %v275 = vadd.f32 %v273, %v274
    %v276 = vrot.slane %v275, 4
    %v277 = vadd.f32 %v275, %v276
    %v278 = vrot.slane %v277, 2
    %v279 = vadd.f32 %v277, %v278
    %v280 = vrot.slane %v279, 1
    %v281 = vadd.f32 %v279, %v280
    %v282 = vadd.f32 %v254, %v258
    %v283 = vsel %vm116, %v262, 0.0
    %v284 = vadd.f32 %v282, %v283
    %v285 = vrot.slane %v284, 4
    %v286 = vadd.f32 %v284, %v285
    %v287 = vrot.slane %v286, 2
    %v288 = vadd.f32 %v286, %v287
    %v289 = vrot.slane %v288, 1
    %v290 = vadd.f32 %v288, %v289
    %v291 = vadd.f32 %v255, %v259
    %v292 = vsel %vm116, %v263, 0.0
    %v293 = vadd.f32 %v291, %v292
    %v294 = vrot.slane %v293, 4
    %v295 = vadd.f32 %v293, %v294
    %v296 = vrot.slane %v295, 2
    %v297 = vadd.f32 %v295, %v296
    %v298 = vrot.slane %v297, 1
    %v299 = vadd.f32 %v297, %v298
    %v300 = vsub.f32 %v232, %v272
    %v301 = vsub.f32 %v233, %v281
    %v302 = vsub.f32 %v234, %v290
    %v303 = vsub.f32 %v235, %v299
    %v304 = vxor.u32 %v272, 2147483648
    %v305 = vxor.u32 %v281, 2147483648
    %v306 = vxor.u32 %v290, 2147483648
    %v307 = vxor.u32 %v299, 2147483648
    %v308 = vmul.f32 %v304, 1.442695
    %v309 = vpow.pop %v308
    %v310 = vmul.f32 %v305, 1.442695
    %v311 = vpow.pop %v310
    %v312 = vmul.f32 %v306, 1.442695
    %v313 = vpow.pop %v312
    %v314 = vmul.f32 %v307, 1.442695
    %v315 = vpow.pop %v314
    %v316 = vadd.f32 %v309, 1.0
    %v317 = vadd.f32 %v311, 1.0
    %v318 = vadd.f32 %v313, 1.0
    %v319 = vadd.f32 %v315, 1.0
    %v320 = vrcp.pop %v316
    %v321 = vmul.f32 %v316, %v320
    %v322 = vsub.f32 1.0, %v321
    %v323 = vmul.f32 %v320, %v322
    %v324 = vadd.f32 %v320, %v323
    %vm325 = vweird.f32 %v316
    %vm326 = vweird.f32 %v320
    %vm327 = vmor %vm325, %vm326
    %v328 = vsel %vm327, %v320, %v324
    %v329 = vand.u32 2147483647, %v316
    %vm330 = vcmp.eq.f32.partialorder %v329, 8.507059e+37
    %v331 = vand.u32 %v316, 2147483648
    %v332 = vor.u32 1.1754944e-38, %v331
    %v333 = vsel %vm330, %v332, %v328
    %v334 = vmul.f32 1.0, %v333
    %v335 = vrcp.pop %v317
    %v336 = vmul.f32 %v317, %v335
    %v337 = vsub.f32 1.0, %v336
    %v338 = vmul.f32 %v335, %v337
    %v339 = vadd.f32 %v335, %v338
    %vm340 = vweird.f32 %v317
    %vm341 = vweird.f32 %v335
    %vm342 = vmor %vm340, %vm341
    %v343 = vsel %vm342, %v335, %v339
    %v344 = vand.u32 2147483647, %v317
    %vm345 = vcmp.eq.f32.partialorder %v344, 8.507059e+37
    %v346 = vand.u32 %v317, 2147483648
    %v347 = vor.u32 1.1754944e-38, %v346
    %v348 = vsel %vm345, %v347, %v343
    %v349 = vmul.f32 1.0, %v348
    %v350 = vrcp.pop %v318
    %v351 = vmul.f32 %v318, %v350
    %v352 = vsub.f32 1.0, %v351
    %v353 = vmul.f32 %v350, %v352
    %v354 = vadd.f32 %v350, %v353
    %vm355 = vweird.f32 %v318
    %vm356 = vweird.f32 %v350
    %vm357 = vmor %vm355, %vm356
    %v358 = vsel %vm357, %v350, %v354
    %v359 = vand.u32 2147483647, %v318
    %vm360 = vcmp.eq.f32.partialorder %v359, 8.507059e+37
    %v361 = vand.u32 %v318, 2147483648
    %v362 = vor.u32 1.1754944e-38, %v361
    %v363 = vsel %vm360, %v362, %v358
    %v364 = vmul.f32 1.0, %v363
    %v365 = vrcp.pop %v319
    %v366 = vmul.f32 %v319, %v365
    %v367 = vsub.f32 1.0, %v366
    %v368 = vmul.f32 %v365, %v367
    %v369 = vadd.f32 %v365, %v368
    %vm370 = vweird.f32 %v319
    %vm371 = vweird.f32 %v365
    %vm372 = vmor %vm370, %vm371
    %v373 = vsel %vm372, %v365, %v369
    %v374 = vand.u32 2147483647, %v319
    %vm375 = vcmp.eq.f32.partialorder %v374, 8.507059e+37
    %v376 = vand.u32 %v319, 2147483648
    %v377 = vor.u32 1.1754944e-38, %v376
    %v378 = vsel %vm375, %v377, %v373
    %v379 = vmul.f32 1.0, %v378
    %v380 = vsub.f32 1.0, %v334
    %v381 = vsub.f32 1.0, %v349
    %v382 = vsub.f32 1.0, %v364
    %v383 = vsub.f32 1.0, %v379
    %v384 = vmax.f32 %v380, 0.0
    %v385 = vmax.f32 %v381, 0.0
    %v386 = vmax.f32 %v382, 0.0
    %v387 = vmax.f32 %v383, 0.0
    %v388 = vrsqrt.pop %v384
    %v389 = vmul.f32 %v388, %v384
    %v390 = vmul.f32 %v389, %v388
    %v391 = vmul.f32 0.5, %v390
    %v392 = vsub.f32 1.5, %v391
    %v393 = vmul.f32 %v388, %v392
    %v394 = vmul.f32 %v384, %v393
    %vm395 = vcmp.eq.f32.partialorder %v384, inf
    %v396 = vsel %vm395, %v384, %v394
    %vm397 = vcmp.eq.f32.partialorder %v384, 0.0
    %v398 = vand.u32 %v384, 2147483648
    %v399 = vsel %vm397, %v398, %v396
    %v400 = vrsqrt.pop %v385
    %v401 = vmul.f32 %v400, %v385
    %v402 = vmul.f32 %v401, %v400
    %v403 = vmul.f32 0.5, %v402
    %v404 = vsub.f32 1.5, %v403
    %v405 = vmul.f32 %v400, %v404
    %v406 = vmul.f32 %v385, %v405
    %vm407 = vcmp.eq.f32.partialorder %v385, inf
    %v408 = vsel %vm407, %v385, %v406
    %vm409 = vcmp.eq.f32.partialorder %v385, 0.0
    %v410 = vand.u32 %v385, 2147483648
    %v411 = vsel %vm409, %v410, %v408
    %v412 = vrsqrt.pop %v386
    %v413 = vmul.f32 %v412, %v386
    %v414 = vmul.f32 %v413, %v412
    %v415 = vmul.f32 0.5, %v414
    %v416 = vsub.f32 1.5, %v415
    %v417 = vmul.f32 %v412, %v416
    %v418 = vmul.f32 %v386, %v417
    %vm419 = vcmp.eq.f32.partialorder %v386, inf
    %v420 = vsel %vm419, %v386, %v418
    %vm421 = vcmp.eq.f32.partialorder %v386, 0.0
    %v422 = vand.u32 %v386, 2147483648
    %v423 = vsel %vm421, %v422, %v420
    %v424 = vrsqrt.pop %v387
    %v425 = vmul.f32 %v424, %v387
    %v426 = vmul.f32 %v425, %v424
    %v427 = vmul.f32 0.5, %v426
    %v428 = vsub.f32 1.5, %v427
    %v429 = vmul.f32 %v424, %v428
    %v430 = vmul.f32 %v387, %v429
    %vm431 = vcmp.eq.f32.partialorder %v387, inf
    %v432 = vsel %vm431, %v387, %v430
    %vm433 = vcmp.eq.f32.partialorder %v387, 0.0
    %v434 = vand.u32 %v387, 2147483648
    %v435 = vsel %vm433, %v434, %v432
    %vm436 = vcmp.eq.s32.totalorder %v65, 16
    %v437 = vsel %vm436, 0.1, 1.0
    %v438 = vld [vmem:[#allocation2] sm:$0xf]
    %v439 = vmul.f32 %v300, %v399
    %v440 = vmul.f32 %v301, %v411
    %v441 = vmul.f32 %v302, %v423
    %v442 = vmul.f32 %v303, %v435
    %v444 = vperm.slane %v437, 0
    %v445 = vperm.slane %v437, 1
    %v446 = vperm.slane %v437, 2
    %v447 = vperm.slane %v437, 3
    %v452 = vmul.f32 %v439, %v444
    %v453 = vmul.f32 %v440, %v445
    %v454 = vmul.f32 %v441, %v446
    %v455 = vmul.f32 %v442, %v447
    %v456 = vmul.f32 %v452, %v91
    %v457 = vmul.f32 %v453, %v92
    %v458 = vmul.f32 %v454, %v93
    %v459 = vmul.f32 %v455, %v94
    %v464 = vrot.slane %v457, 7
    %v465 = vrot.slane %v458, 6
    %v466 = vrot.slane %v459, 5
    %v467 = vsel %vm116, %v456, %v464
    %vm468 = vcmask 1042434
    %v469 = vsel %vm468, %v465, %v466
    %vm470 = vcmask 1041408
    %v471 = vsel %vm470, %v467, %v469
    %v473 = vadd.f32 %v438, %v471
    %v474 = vlaneseq
    %vm475 = vcmp.ge.s32.totalorder %v474, 0
    %vm476 = vcmp.lt.s32.totalorder %v474, 512
    %vm477 = vmand %vm475, %vm476
    %478 = vst.msk [vmem:[#allocation2] sm:$0xf] %vm477, %v473
    %vm479 = vcmp.ne.s32.totalorder %v65, 16
    %v484 = vrot.slane %v92, 7
    %v485 = vrot.slane %v93, 6
    %v486 = vrot.slane %v94, 5
    %v487 = vsel %vm116, %v91, %v484
    %v488 = vsel %vm468, %v485, %v486
    %v489 = vsel %vm470, %v487, %v488
    %v491 = vsel %vm479, %v489, 0.0
    %vm492 = vcmp.ge.f32.partialorder %v272, %v124
    %vm493 = vcmp.ge.f32.partialorder %v281, %v133
    %vm494 = vcmp.ge.f32.partialorder %v290, %v142
    %vm495 = vcmp.ge.f32.partialorder %v299, %v151
    %v497 = vperm.slane %v491, 0
    %v498 = vperm.slane %v491, 1
    %v499 = vperm.slane %v491, 2
    %v500 = vperm.slane %v491, 3
    %v505 = vsel %vm492, %v497, 0.0
    %v506 = vsel %vm493, %v498, 0.0
    %v507 = vsel %vm494, %v499, 0.0
    %v508 = vsel %vm495, %v500, 0.0
    %v509 = vld [vmem:[#allocation3] sm:$0xf]
    %v514 = vrot.slane %v506, 7
    %v515 = vrot.slane %v507, 6
    %v516 = vrot.slane %v508, 5
    %v517 = vsel %vm116, %v505, %v514
    %v518 = vsel %vm468, %v515, %v516
    %v519 = vsel %vm470, %v517, %v518
    %v521 = vadd.f32 %v509, %v519
    %522 = vst.msk [vmem:[#allocation3] sm:$0xf] %vm477, %v521
    %v523 = vld [vmem:[#allocation4] sm:$0xf]
    %v524 = vadd.f32 %v523, %v491
    %525 = vst.msk [vmem:[#allocation4] sm:$0xf] %vm477, %v524
    // Predicated region
    $region22: #{_device_criterion.1} parent=1 // pred_check
      %p526 = pneg %p30
    $region23: #{_device_criterion.1} parent=1 // pred_check_branch
      %528 = sbr.rel (%p526) target = $region25
    $region24: #{_device_criterion.1} parent=1 // pred_region
      %v529 = vld [vmem:[%s4] sm:$0xf]
      %v530 = vld [vmem:[%s5] sm:$0xf]
      %s531 = sld [smem:[#allocation7 + $0x1]]
      %v532 = vstv %s531
      %vm533 = vcmp.lt.s32.totalorder %v67, %v532
      %v534 = vsel %vm533, 1, 0
      %v535 = vcvt.s32.f32 %v534
      %v536 = vsub.f32 %v529, %v530
      %v537 = vand.u32 2147483647, %v536
      %v538 = vmul.f32 %v537, %v535
      %vm539 = vcmask 1043456
      %v540 = vsel %vm539, %v538, 0.0
      %541 = vadd.xlane.f32.xlu0 %v540
      %v542 = vpop.xlane.xlu0 %541
      %v543 = vrot.slane %v542, 4
      %v544 = vadd.f32 %v542, %v543
      %v545 = vrot.slane %v544, 2
      %v546 = vadd.f32 %v544, %v545
      %v547 = vrot.slane %v546, 1
      %v548 = vadd.f32 %v546, %v547
      %s549 = vtos %v548
      %v550 = vmul.f32 %v529, 0.5
      %v552 = vrot.slane %v550, 2
      %v554 = vsub.f32 %v529, %v552
      %v555 = vadd.f32 %v529, %v552
      %v556 = vmul.f32 %v530, 0.5
      %v558 = vrot.slane %v556, 2
      %v560 = vsub.f32 %v530, %v558
      %v561 = vadd.f32 %v530, %v558
      %v562 = vsub.f32 %v555, %v554
      %v564 = vrot.slane %v562, 1
      %v566 = vmul.f32 %v562, %v564
      %v567 = vsub.f32 %v561, %v560
      %v569 = vrot.slane %v567, 1
      %v571 = vmul.f32 %v567, %v569
      %v572 = vmax.f32 %v554, %v560
      %v573 = vmin.f32 %v555, %v561
      %v574 = vsub.f32 %v573, %v572
      %v575 = vmax.f32 %v574, 0.0
      %v577 = vrot.slane %v575, 1
      %v579 = vmul.f32 %v575, %v577
      %v580 = vadd.f32 %v566, %v571
      %v581 = vsub.f32 %v580, %v579
      %vm582 = vcmp.gt.f32.partialorder %v535, 0.0
      %v583 = vsel %vm582, %v581, 1.0
      %v584 = vrcp.pop %v583
      %v585 = vmul.f32 %v583, %v584
      %v586 = vsub.f32 1.0, %v585
      %v587 = vmul.f32 %v584, %v586
      %v588 = vadd.f32 %v584, %v587
      %vm589 = vweird.f32 %v583
      %vm590 = vweird.f32 %v584
      %vm591 = vmor %vm589, %vm590
      %v592 = vsel %vm591, %v584, %v588
      %v593 = vand.u32 2147483647, %v583
      %vm594 = vcmp.eq.f32.partialorder %v593, 8.507059e+37
      %v595 = vand.u32 %v583, 2147483648
      %v596 = vor.u32 1.1754944e-38, %v595
      %v597 = vsel %vm594, %v596, %v592
      %v598 = vmul.f32 %v579, %v597
      %v599 = vmin.f32 %v554, %v560
      %v600 = vmax.f32 %v555, %v561
      %v601 = vsub.f32 %v600, %v599
      %v602 = vmax.f32 %v601, 0.0
      %v604 = vrot.slane %v602, 1
      %v606 = vmul.f32 %v602, %v604
      %v607 = vsel %vm582, %v606, 1.0
      %v608 = vsub.f32 %v606, %v581
      %v609 = vrcp.pop %v607
      %v610 = vmul.f32 %v607, %v609
      %v611 = vsub.f32 1.0, %v610
      %v612 = vmul.f32 %v609, %v611
      %v613 = vadd.f32 %v609, %v612
      %vm614 = vweird.f32 %v607
      %vm615 = vweird.f32 %v609
      %vm616 = vmor %vm614, %vm615
      %v617 = vsel %vm616, %v609, %v613
      %v618 = vand.u32 2147483647, %v607
      %vm619 = vcmp.eq.f32.partialorder %v618, 8.507059e+37
      %v620 = vand.u32 %v607, 2147483648
      %v621 = vor.u32 1.1754944e-38, %v620
      %v622 = vsel %vm619, %v621, %v617
      %v623 = vmul.f32 %v608, %v622
      %v624 = vsub.f32 %v598, %v623
      %v625 = vsub.f32 1.0, %v624
      %v626 = vmul.f32 %v625, %v535
      %v627 = vsel %vm116, %v626, 0.0
      %628 = vadd.xlane.f32.xlu0 %v627
      %v629 = vpop.xlane.xlu0 %628
      %v630 = vrot.slane %v629, 4
      %v631 = vadd.f32 %v629, %v630
      %v632 = vrot.slane %v631, 2
      %v633 = vadd.f32 %v631, %v632
      %v634 = vrot.slane %v633, 1
      %v635 = vadd.f32 %v633, %v634
      %s636 = vtos %v635
      %v637 = vld [vmem:[#allocation2] sm:$0xf]
      %v639 = vperm.slane %v637, 0
      %v640 = vperm.slane %v637, 1
      %v641 = vperm.slane %v637, 2
      %v642 = vperm.slane %v637, 3
      %v647 = vsel %vm116, %v639, 0.0
      %v648 = vsel %vm116, %v640, 0.0
      %v649 = vadd.f32 %v647, %v648
      %v650 = vsel %vm116, %v641, 0.0
      %v651 = vadd.f32 %v649, %v650
      %v652 = vsel %vm116, %v642, 0.0
      %v653 = vadd.f32 %v651, %v652
      %654 = vadd.xlane.f32.xlu0 %v653
      %v655 = vpop.xlane.xlu0 %654
      %v656 = vrot.slane %v655, 4
      %v657 = vadd.f32 %v655, %v656
      %v658 = vrot.slane %v657, 2
      %v659 = vadd.f32 %v657, %v658
      %v660 = vrot.slane %v659, 1
      %v661 = vadd.f32 %v659, %v660
      %s662 = vtos %v661
      %v663 = vld [vmem:[#allocation3] sm:$0xf]
      %v665 = vperm.slane %v663, 0
      %v666 = vperm.slane %v663, 1
      %v667 = vperm.slane %v663, 2
      %v668 = vperm.slane %v663, 3
      %v673 = vsel %vm116, %v665, 0.0
      %v674 = vsel %vm116, %v666, 0.0
      %v675 = vadd.f32 %v673, %v674
      %v676 = vsel %vm116, %v667, 0.0
      %v677 = vadd.f32 %v675, %v676
      %v678 = vsel %vm116, %v668, 0.0
      %v679 = vadd.f32 %v677, %v678
      %680 = vadd.xlane.f32.xlu0 %v679
      %v681 = vpop.xlane.xlu0 %680
      %v682 = vrot.slane %v681, 4
      %v683 = vadd.f32 %v681, %v682
      %v684 = vrot.slane %v683, 2
      %v685 = vadd.f32 %v683, %v684
      %v686 = vrot.slane %v685, 1
      %v687 = vadd.f32 %v685, %v686
      %s688 = vtos %v687
      %v689 = vld [vmem:[#allocation4] sm:$0xf]
      %v691 = vperm.slane %v689, 0
      %v692 = vperm.slane %v689, 1
      %v693 = vperm.slane %v689, 2
      %v694 = vperm.slane %v689, 3
      %v699 = vsel %vm116, %v691, 0.0
      %v700 = vsel %vm116, %v692, 0.0
      %v701 = vadd.f32 %v699, %v700
      %v702 = vsel %vm116, %v693, 0.0
      %v703 = vadd.f32 %v701, %v702
      %v704 = vsel %vm116, %v694, 0.0
      %v705 = vadd.f32 %v703, %v704
      %706 = vadd.xlane.f32.xlu0 %v705
      %v707 = vpop.xlane.xlu0 %706
      %v708 = vrot.slane %v707, 4
      %v709 = vadd.f32 %v707, %v708
      %v710 = vrot.slane %v709, 2
      %v711 = vadd.f32 %v709, %v710
      %v712 = vrot.slane %v711, 1
      %v713 = vadd.f32 %v711, %v712
      %s714 = vtos %v713
      %s715 = sld [smem:[#allocation6]]
      %s716 = smax.f32 %s714, 1.0
      %v717 = vstv %s715
      %v718 = vrcp.pop %v717
      %v719 = vmul.f32 %v717, %v718
      %v720 = vsub.f32 1.0, %v719
      %v721 = vmul.f32 %v718, %v720
      %v722 = vadd.f32 %v718, %v721
      %vm723 = vweird.f32 %v717
      %vm724 = vweird.f32 %v718
      %vm725 = vmor %vm723, %vm724
      %v726 = vsel %vm725, %v718, %v722
      %v727 = vand.u32 2147483647, %v717
      %vm728 = vcmp.eq.f32.partialorder %v727, 8.507059e+37
      %v729 = vand.u32 %v717, 2147483648
      %v730 = vor.u32 1.1754944e-38, %v729
      %v731 = vsel %vm728, %v730, %v726
      %s732 = vtos %v731
      %s733 = smul.f32 %s662, %s732
      %s734 = scalar_lea.smem [#allocation8], 0
      %735 = sst [smem:[%s734]] %s733
      %s736 = smul.f32 %s688, 100.0
      %v737 = vstv %s716
      %v738 = vrcp.pop %v737
      %v739 = vmul.f32 %v737, %v738
      %v740 = vsub.f32 1.0, %v739
      %v741 = vmul.f32 %v738, %v740
      %v742 = vadd.f32 %v738, %v741
      %vm743 = vweird.f32 %v737
      %vm744 = vweird.f32 %v738
      %vm745 = vmor %vm743, %vm744
      %v746 = vsel %vm745, %v738, %v742
      %v747 = vand.u32 2147483647, %v737
      %vm748 = vcmp.eq.f32.partialorder %v747, 8.507059e+37
      %v749 = vand.u32 %v737, 2147483648
      %v750 = vor.u32 1.1754944e-38, %v749
      %v751 = vsel %vm748, %v750, %v746
      %s752 = vtos %v751
      %s753 = smul.f32 %s736, %s752
      %s754 = ssub.f32 100.0, %s753
      %s755 = scalar_lea.smem [#allocation8], 1
      %756 = sst [smem:[%s755]] %s754
      %v757 = vstv %s715
      %v758 = vrcp.pop %v757
      %v759 = vmul.f32 %v757, %v758
      %v760 = vsub.f32 1.0, %v759
      %v761 = vmul.f32 %v758, %v760
      %v762 = vadd.f32 %v758, %v761
      %vm763 = vweird.f32 %v757
      %vm764 = vweird.f32 %v758
      %vm765 = vmor %vm763, %vm764
      %v766 = vsel %vm765, %v758, %v762
      %v767 = vand.u32 2147483647, %v757
      %vm768 = vcmp.eq.f32.partialorder %v767, 8.507059e+37
      %v769 = vand.u32 %v757, 2147483648
      %v770 = vor.u32 1.1754944e-38, %v769
      %v771 = vsel %vm768, %v770, %v766
      %s772 = vtos %v771
      %s773 = smul.f32 %s549, %s772
      %s774 = scalar_lea.smem [#allocation8], 2
      %775 = sst [smem:[%s774]] %s773
      %v776 = vstv %s715
      %v777 = vrcp.pop %v776
      %v778 = vmul.f32 %v776, %v777
      %v779 = vsub.f32 1.0, %v778
      %v780 = vmul.f32 %v777, %v779
      %v781 = vadd.f32 %v777, %v780
      %vm782 = vweird.f32 %v776
      %vm783 = vweird.f32 %v777
      %vm784 = vmor %vm782, %vm783
      %v785 = vsel %vm784, %v777, %v781
      %v786 = vand.u32 2147483647, %v776
      %vm787 = vcmp.eq.f32.partialorder %v786, 8.507059e+37
      %v788 = vand.u32 %v776, 2147483648
      %v789 = vor.u32 1.1754944e-38, %v788
      %v790 = vsel %vm787, %v789, %v785
      %s791 = vtos %v790
      %s792 = smul.f32 %s636, %s791
      %s793 = scalar_lea.smem [#allocation8], 3
      %794 = sst [smem:[%s793]] %s792
    $region25: #{_device_criterion.1} parent=1 // pred_fallthru
      _
    // Predicated region
    $region26: #{_device_criterion.1} parent=1 // pred_check
      _
    $region27: #{_device_criterion.1} parent=1 // pred_check_branch
      %796 = sbr.rel (0) target = $region29
    $region28: #{_device_criterion.1} parent=1 // pred_region
      %798 = vsyncadd [#allocation9], 0
      %s800 = sshll.u32 %s6, 4
      %s801 = int_to_ptr.vmem [resolvable:$true] %s800
      %803 = dma.smem_to_vmem [#allocation8], 16, %s801, [#allocation9]
    $region29: #{_device_criterion.1} parent=1 // pred_fallthru
      _
    // Predicated region
    $region30: #{_device_criterion.1} parent=1 // pred_check
      _
    $region31: #{_device_criterion.1} parent=1 // pred_check_branch
      %805 = sbr.rel (0) target = $region33
    $region32: #{_device_criterion.1} parent=1 // pred_region
      %807 = dma.done [#allocation9], 16
    $region33: #{_device_criterion.1} parent=1 // pred_fallthru
      _
    %808 = sfence
    %809 = vsyncpa [#allocation9], 1

</llo_original>
